<compile_context>
chip_gen: v6e
topology: v6e:2x2x1
jax: 0.10.0
libtpu: 0.0.40
codegen_flags: <defaults>
</compile_context>

<pallas_src>
import functools

import jax
import jax.numpy as jnp
from jax.experimental import pallas as pl
from jax.experimental.pallas import tpu as pltpu


def _gnn_layer_kernel(adj_ref, feat_ref, w_ref, out_ref):
    """One GNN layer on a row-block of adj: relu((adj_blk @ feat) @ W)."""
    # bf16 operands, f32 accumulation on the MXU.
    agg = jnp.dot(adj_ref[...], feat_ref[...],
                  preferred_element_type=jnp.float32)            # (tm, f_in) f32
    out = jnp.dot(agg.astype(jnp.bfloat16), w_ref[...],
                  preferred_element_type=jnp.float32)            # (tm, f_out) f32
    out_ref[...] = jnp.maximum(out, 0.0).astype(out_ref.dtype)   # ReLU in f32


def _gnn_layer(adj_bf, feat_bf, w_bf, out_dtype, row_block):
    """Row-parallel pallas_call for one GNN layer."""
    n = adj_bf.shape[0]
    f_in = feat_bf.shape[1]
    f_out = w_bf.shape[1]
    nb = n // row_block

    cost = pl.CostEstimate(
        flops=2 * n * n * f_in + 2 * n * f_in * f_out,
        transcendentals=0,
        bytes_accessed=(2 * n * n                       # adj (bf16), each row-block once
                        + nb * 2 * (n * f_in + f_in * f_out)  # feat + W reloaded per block
                        + n * f_out * jnp.dtype(out_dtype).itemsize),
    )

    return pl.pallas_call(
        _gnn_layer_kernel,
        out_shape=jax.ShapeDtypeStruct((n, f_out), out_dtype),
        grid_spec=pltpu.PrefetchScalarGridSpec(
            num_scalar_prefetch=0,
            grid=(nb,),
            in_specs=[
                pl.BlockSpec((row_block, n), lambda i: (i, 0)),   # adj row block
                pl.BlockSpec((n, f_in), lambda i: (0, 0)),        # full features
                pl.BlockSpec((f_in, f_out), lambda i: (0, 0)),    # full weight
            ],
            out_specs=pl.BlockSpec((row_block, f_out), lambda i: (i, 0)),
        ),
        compiler_params=pltpu.CompilerParams(
            dimension_semantics=("parallel",),   # shard row blocks across TCs (v7x megacore)
        ),
        cost_estimate=cost,
    )(adj_bf, feat_bf, w_bf)


def _pick_row_block(n):
    """Largest row block that is a multiple of 8, divides N, and gives >=2 blocks."""
    for rb in (512, 256, 128, 64, 32, 16, 8):
        if rb <= n // 2 and n % rb == 0:
            return rb
    return n  # tiny N: single block


def _pad_axis(a, axis, mult=128):
    pad = (-a.shape[axis]) % mult
    if pad == 0:
        return a
    widths = [(0, 0)] * a.ndim
    widths[axis] = (0, pad)
    return jnp.pad(a, widths)


@functools.partial(jax.jit, static_argnames=("row_block",))
def genn_forward(x, adj, w1, w2, *, row_block=None):
    n = x.shape[0]
    n_z = w2.shape[1]
    if row_block is None:
        row_block = _pick_row_block(n)

    # bf16 MXU inputs (halves adj HBM traffic); accumulation stays f32 in-kernel.
    adj_bf = adj.astype(jnp.bfloat16)
    x_bf = x.astype(jnp.bfloat16)

    # Lane-dense outputs: pad out_features of both layers to a multiple of 128
    # (zero columns -> zero outputs, sliced off at the end).  W2 rows are padded
    # to match the padded h1 width (padded h1 columns are exactly zero).
    w1_p = _pad_axis(w1.astype(jnp.bfloat16), axis=1)
    w2_p = _pad_axis(_pad_axis(w2.astype(jnp.bfloat16), axis=1), axis=0)

    # Layer 1: h1 = relu(adj @ (x @ W1)), computed as relu((adj @ x) @ W1).
    h1 = _gnn_layer(adj_bf, x_bf, w1_p, jnp.bfloat16, row_block)   # (N, pad128(n_enc_1)) bf16
    # Layer 2: out = relu(adj @ (h1 @ W2)), computed as relu((adj @ h1) @ W2).
    out = _gnn_layer(adj_bf, h1, w2_p, jnp.float32, row_block)     # (N, pad128(n_z)) f32

    return out[:, :n_z]


def xavier_uniform(key, fan_in, fan_out):
    bound = (6.0 / (fan_in + fan_out)) ** 0.5
    return jax.random.uniform(
        key, (fan_in, fan_out), dtype=jnp.float32, minval=-bound, maxval=bound
    )


if __name__ == "__main__":
    # GENN(n_enc_1=64, n_input=32, n_z=32), N=128 nodes
    N, n_input, n_enc_1, n_z = 128, 32, 64, 32

    key = jax.random.PRNGKey(0)
    kx, kadj, kw1, kw2 = jax.random.split(key, 4)

    x = jax.random.normal(kx, (N, n_input), dtype=jnp.float32)
    adj_raw = jax.random.uniform(kadj, (N, N), dtype=jnp.float32)
    adj = (adj_raw + adj_raw.T) * 0.5  # symmetric-ish non-negative dense "adjacency"

    w1 = xavier_uniform(kw1, n_input, n_enc_1)
    w2 = xavier_uniform(kw2, n_enc_1, n_z)

    out = genn_forward(x, adj, w1, w2)
    jax.block_until_ready(out)

    # Pure-JAX f32 reference; tolerance relaxed because the kernel uses bf16
    # MXU inputs / bf16 intermediate h1 (f32 accumulation).
    ref = jnp.maximum(adj @ jnp.maximum(adj @ (x @ w1), 0.0) @ w2, 0.0)
    assert out.shape == (N, n_z)
    rel_err = jnp.max(jnp.abs(out - ref)) / (jnp.max(jnp.abs(ref)) + 1e-6)
    assert rel_err < 3e-2, f"relative error too large: {rel_err}"

    print("KERNEL_OK")
</pallas_src>

<mosaic_0001>
module attributes {stable_mosaic.version = 11 : i64} {
  func.func @_gnn_layer_kernel(%arg0: i32, %arg1: memref<64x128xbf16, #tpu.memory_space<vmem>>, %arg2: memref<128x128xbf16, #tpu.memory_space<vmem>>, %arg3: memref<128x128xbf16, #tpu.memory_space<vmem>>, %arg4: memref<64x128xf32, #tpu.memory_space<vmem>>) attributes {dimension_semantics = [#tpu.dimension_semantics<parallel>], iteration_bounds = array<i64: 2>, scalar_prefetch = 0 : i64, scratch_operands = 0 : i64, tpu.core_type = #tpu.core_type<tc>, window_params = [{transform_indices = @transform_0, window_bounds = array<i64: 64, 128>}, {pipeline_mode = #tpu.pipeline_mode<synchronous>, transform_indices = @transform_1, window_bounds = array<i64: 128, 128>}, {pipeline_mode = #tpu.pipeline_mode<synchronous>, transform_indices = @transform_2, window_bounds = array<i64: 128, 128>}, {transform_indices = @transform_3, window_bounds = array<i64: 64, 128>}]} {
    %c0 = arith.constant 0 : index
    %c0_0 = arith.constant 0 : index
    %0 = vector.load %arg1[%c0, %c0_0] : memref<64x128xbf16, #tpu.memory_space<vmem>>, vector<64x128xbf16>
    %c0_1 = arith.constant 0 : index
    %c0_2 = arith.constant 0 : index
    %1 = vector.load %arg2[%c0_1, %c0_2] : memref<128x128xbf16, #tpu.memory_space<vmem>>, vector<128x128xbf16>
    %cst = arith.constant dense<0.000000e+00> : vector<64x128xf32>
    %2 = tpu.matmul %0, %1, %cst {dimension_numbers = #tpu.dot_dimension_numbers<[1], [0], [0], [1], [0, 0, 1, 1], [], []>} : vector<64x128xbf16>, vector<128x128xbf16>, vector<64x128xf32> -> vector<64x128xf32>
    %3 = arith.truncf %2 : vector<64x128xf32> to vector<64x128xbf16>
    %c0_3 = arith.constant 0 : index
    %c0_4 = arith.constant 0 : index
    %4 = vector.load %arg3[%c0_3, %c0_4] : memref<128x128xbf16, #tpu.memory_space<vmem>>, vector<128x128xbf16>
    %cst_5 = arith.constant dense<0.000000e+00> : vector<64x128xf32>
    %5 = tpu.matmul %3, %4, %cst_5 {dimension_numbers = #tpu.dot_dimension_numbers<[1], [0], [0], [1], [0, 0, 1, 1], [], []>} : vector<64x128xbf16>, vector<128x128xbf16>, vector<64x128xf32> -> vector<64x128xf32>
    %cst_6 = arith.constant 0.000000e+00 : f32
    %6 = vector.broadcast %cst_6 : f32 to vector<64x128xf32>
    %7 = arith.maximumf %5, %6 : vector<64x128xf32>
    %c0_7 = arith.constant 0 : index
    %c0_8 = arith.constant 0 : index
    %8 = vector.load %arg4[%c0_7, %c0_8] : memref<64x128xf32, #tpu.memory_space<vmem>>, vector<64x128xf32>
    tpu.vector_store %arg4[%c0_7, %c0_8], %7 {strides = array<i32>} : memref<64x128xf32, #tpu.memory_space<vmem>>, vector<64x128xf32>,
    return
  }
  func.func @transform_0(%arg0: i32) -> (i32, i32) {
    %c0_i32 = arith.constant 0 : i32
    %c0_i32_0 = arith.constant 0 : i32
    return %arg0, %c0_i32 : i32, i32
  }
  func.func @transform_1(%arg0: i32) -> (i32, i32) {
    %c0_i32 = arith.constant 0 : i32
    %c0_i32_0 = arith.constant 0 : i32
    %c0_i32_1 = arith.constant 0 : i32
    return %c0_i32, %c0_i32_0 : i32, i32
  }
  func.func @transform_2(%arg0: i32) -> (i32, i32) {
    %c0_i32 = arith.constant 0 : i32
    %c0_i32_0 = arith.constant 0 : i32
    %c0_i32_1 = arith.constant 0 : i32
    return %c0_i32, %c0_i32_0 : i32, i32
  }
  func.func @transform_3(%arg0: i32) -> (i32, i32) {
    %c0_i32 = arith.constant 0 : i32
    %c0_i32_0 = arith.constant 0 : i32
    return %arg0, %c0_i32 : i32, i32
  }
}

module attributes {stable_mosaic.version = 11 : i64} {
  func.func @_gnn_layer_kernel(%arg0: i32, %arg1: memref<64x128xbf16, #tpu.memory_space<vmem>>, %arg2: memref<128x32xbf16, #tpu.memory_space<vmem>>, %arg3: memref<32x128xbf16, #tpu.memory_space<vmem>>, %arg4: memref<64x128xbf16, #tpu.memory_space<vmem>>) attributes {dimension_semantics = [#tpu.dimension_semantics<parallel>], iteration_bounds = array<i64: 2>, scalar_prefetch = 0 : i64, scratch_operands = 0 : i64, tpu.core_type = #tpu.core_type<tc>, window_params = [{transform_indices = @transform_0, window_bounds = array<i64: 64, 128>}, {pipeline_mode = #tpu.pipeline_mode<synchronous>, transform_indices = @transform_1, window_bounds = array<i64: 128, 32>}, {pipeline_mode = #tpu.pipeline_mode<synchronous>, transform_indices = @transform_2, window_bounds = array<i64: 32, 128>}, {transform_indices = @transform_3, window_bounds = array<i64: 64, 128>}]} {
    %c0 = arith.constant 0 : index
    %c0_0 = arith.constant 0 : index
    %0 = vector.load %arg1[%c0, %c0_0] : memref<64x128xbf16, #tpu.memory_space<vmem>>, vector<64x128xbf16>
    %c0_1 = arith.constant 0 : index
    %c0_2 = arith.constant 0 : index
    %1 = vector.load %arg2[%c0_1, %c0_2] : memref<128x32xbf16, #tpu.memory_space<vmem>>, vector<128x32xbf16>
    %cst = arith.constant dense<0.000000e+00> : vector<64x32xf32>
    %2 = tpu.matmul %0, %1, %cst {dimension_numbers = #tpu.dot_dimension_numbers<[1], [0], [0], [1], [0, 0, 1, 1], [], []>} : vector<64x128xbf16>, vector<128x32xbf16>, vector<64x32xf32> -> vector<64x32xf32>
    %3 = arith.truncf %2 : vector<64x32xf32> to vector<64x32xbf16>
    %c0_3 = arith.constant 0 : index
    %c0_4 = arith.constant 0 : index
    %4 = vector.load %arg3[%c0_3, %c0_4] : memref<32x128xbf16, #tpu.memory_space<vmem>>, vector<32x128xbf16>
    %cst_5 = arith.constant dense<0.000000e+00> : vector<64x128xf32>
    %5 = tpu.matmul %3, %4, %cst_5 {dimension_numbers = #tpu.dot_dimension_numbers<[1], [0], [0], [1], [0, 0, 1, 1], [], []>} : vector<64x32xbf16>, vector<32x128xbf16>, vector<64x128xf32> -> vector<64x128xf32>
    %cst_6 = arith.constant 0.000000e+00 : f32
    %6 = vector.broadcast %cst_6 : f32 to vector<64x128xf32>
    %7 = arith.maximumf %5, %6 : vector<64x128xf32>
    %8 = arith.truncf %7 : vector<64x128xf32> to vector<64x128xbf16>
    %c0_7 = arith.constant 0 : index
    %c0_8 = arith.constant 0 : index
    %9 = vector.load %arg4[%c0_7, %c0_8] : memref<64x128xbf16, #tpu.memory_space<vmem>>, vector<64x128xbf16>
    tpu.vector_store %arg4[%c0_7, %c0_8], %8 {strides = array<i32>} : memref<64x128xbf16, #tpu.memory_space<vmem>>, vector<64x128xbf16>,
    return
  }
  func.func @transform_0(%arg0: i32) -> (i32, i32) {
    %c0_i32 = arith.constant 0 : i32
    %c0_i32_0 = arith.constant 0 : i32
    return %arg0, %c0_i32 : i32, i32
  }
  func.func @transform_1(%arg0: i32) -> (i32, i32) {
    %c0_i32 = arith.constant 0 : i32
    %c0_i32_0 = arith.constant 0 : i32
    %c0_i32_1 = arith.constant 0 : i32
    return %c0_i32, %c0_i32_0 : i32, i32
  }
  func.func @transform_2(%arg0: i32) -> (i32, i32) {
    %c0_i32 = arith.constant 0 : i32
    %c0_i32_0 = arith.constant 0 : i32
    %c0_i32_1 = arith.constant 0 : i32
    return %c0_i32, %c0_i32_0 : i32, i32
  }
  func.func @transform_3(%arg0: i32) -> (i32, i32) {
    %c0_i32 = arith.constant 0 : i32
    %c0_i32_0 = arith.constant 0 : i32
    return %arg0, %c0_i32 : i32, i32
  }
}

</mosaic_0001>

<llo_original>
// kernel: genn_forward.2
$region0: #{genn_forward.2}
  #allocation0 [shape = 'u32[]', space=smem, size = 0x4, offset = 0x4, fixed_abs, tag = 'smem constant byte address 0x4 - core index']
  #allocation1 [shape = 'u32[144,128]{1,0:T(1,128)}', space=vmem, size = 0x12000, scoped, tag = 'internal scratch']
  %s0 = inlined_call_operand.vmem [shape: bf16[128,128], index: 0, kind: input, shape index: {}]
  %s1 = inlined_call_operand.vmem [shape: bf16[128,32], index: 1, kind: input, shape index: {}]
  %s2 = inlined_call_operand.vmem [shape: bf16[32,128], index: 2, kind: input, shape index: {}]
  %s3 = inlined_call_operand.vmem [shape: bf16[128,128], index: 3, kind: output, shape index: {}]
  %s4 = sld [smem:[#allocation0]]
  $region45: #{genn_forward.2} parent=0
    _
  %s6 = ssub.s32 1, %s4
  %s7 = scalar_select 0, %s6, %s4
  loop: start=0, step=1, limit=4
  $region2: #{genn_forward.2} parent=0 // loop_pre_header
    _
  $region3: #{genn_forward.2} parent=0 // loop_header
    %s9 = sphi 0, %s13
    %p10 = scmp.ge.s32.totalorder %s9, 4
    %s19 = sphi 0, %s21
    %s22 = sphi 0, %s19
    %s23 = sphi 0, %s22
    %s39 = sphi 0, %s23
    %s43 = sphi 0, %s43
    %s45 = sphi 0, %s43
    %s46 = sphi 0, %s45
    %s60 = sphi 0, %s46
    %s64 = sphi 0, %s64
    %s66 = sphi 0, %s64
    %s67 = sphi 0, %s66
    %s81 = sphi 0, %s67
    %s87 = sphi 0, %s89
    %s90 = sphi 0, %s87
    %s91 = sphi 0, %s90
    %s107 = sphi 0, %s91
  $region4: #{genn_forward.2} parent=0 // loop_header_branch
    %12 = sbr.rel (%p10) target = $region8
  $region5: #{genn_forward.2} parent=0 // loop_body
    %s14 = ssub.s32 %s9, 1
    %s15 = ssub.s32 %s9, 2
    %s16 = sadd.s32 %s9, 1
    %s17 = ssub.s32 %s9, %s16
    %p18 = scmp.eq.s32.totalorder %s17, 0
    %s20 = sadd.s32 %s19, 1
    %s21 = scalar_select %p18, %s19, %s20
    %p24 = pneg %p18
    %p25 = scmp.eq.s32.totalorder %s9, 1
    %p26 = por %p24, %p25
    %p27 = scmp.ne.s32.totalorder %s19, %s22
    %p28 = scmp.eq.s32.totalorder %s9, 0
    %p29 = por %p27, %p28
    %p30 = scmp.ne.s32.totalorder %s19, %s22
    %p31 = scmp.eq.s32.totalorder %s14, 1
    %p32 = por %p30, %p31
    %p33 = scmp.ne.s32.totalorder %s22, %s23
    %p34 = scmp.eq.s32.totalorder %s14, 0
    %p35 = por %p33, %p34
    %p36 = scmp.ne.s32.totalorder %s22, %s23
    %p37 = scmp.eq.s32.totalorder %s15, 1
    %p38 = por %p36, %p37
    %p40 = scmp.ne.s32.totalorder %s23, %s39
    %p41 = scmp.eq.s32.totalorder %s15, 0
    %p42 = por %p40, %p41
    %s44 = sadd.s32 %s43, 1
    %p47 = scmp.eq.s32.totalorder %s9, 1
    %p48 = scmp.ne.s32.totalorder %s43, %s45
    %p49 = scmp.eq.s32.totalorder %s9, 0
    %p50 = por %p48, %p49
    %p51 = scmp.ne.s32.totalorder %s43, %s45
    %p52 = scmp.eq.s32.totalorder %s14, 1
    %p53 = por %p51, %p52
    %p54 = scmp.ne.s32.totalorder %s45, %s46
    %p55 = scmp.eq.s32.totalorder %s14, 0
    %p56 = por %p54, %p55
    %p57 = scmp.ne.s32.totalorder %s45, %s46
    %p58 = scmp.eq.s32.totalorder %s15, 1
    %p59 = por %p57, %p58
    %p61 = scmp.ne.s32.totalorder %s46, %s60
    %p62 = scmp.eq.s32.totalorder %s15, 0
    %p63 = por %p61, %p62
    %s65 = sadd.s32 %s64, 1
    %p68 = scmp.eq.s32.totalorder %s9, 1
    %p69 = scmp.ne.s32.totalorder %s64, %s66
    %p70 = scmp.eq.s32.totalorder %s9, 0
    %p71 = por %p69, %p70
    %p72 = scmp.ne.s32.totalorder %s64, %s66
    %p73 = scmp.eq.s32.totalorder %s14, 1
    %p74 = por %p72, %p73
    %p75 = scmp.ne.s32.totalorder %s66, %s67
    %p76 = scmp.eq.s32.totalorder %s14, 0
    %p77 = por %p75, %p76
    %p78 = scmp.ne.s32.totalorder %s66, %s67
    %p79 = scmp.eq.s32.totalorder %s15, 1
    %p80 = por %p78, %p79
    %p82 = scmp.ne.s32.totalorder %s67, %s81
    %p83 = scmp.eq.s32.totalorder %s15, 0
    %p84 = por %p82, %p83
    %s85 = ssub.s32 %s9, %s16
    %p86 = scmp.eq.s32.totalorder %s85, 0
    %s88 = sadd.s32 %s87, 1
    %s89 = scalar_select %p86, %s87, %s88
    %p92 = pneg %p86
    %p93 = scmp.eq.s32.totalorder %s9, 1
    %p94 = por %p92, %p93
    %p95 = scmp.ne.s32.totalorder %s87, %s90
    %p96 = scmp.eq.s32.totalorder %s9, 0
    %p97 = por %p95, %p96
    %p98 = scmp.ne.s32.totalorder %s87, %s90
    %p99 = scmp.eq.s32.totalorder %s14, 1
    %p100 = por %p98, %p99
    %p101 = scmp.ne.s32.totalorder %s90, %s91
    %p102 = scmp.eq.s32.totalorder %s14, 0
    %p103 = por %p101, %p102
    %p104 = scmp.ne.s32.totalorder %s90, %s91
    %p105 = scmp.eq.s32.totalorder %s15, 1
    %p106 = por %p104, %p105
    %p108 = scmp.ne.s32.totalorder %s91, %s107
    %p109 = scmp.eq.s32.totalorder %s15, 0
    %p110 = por %p108, %p109
    %p111 = scmp.le.s32.totalorder 1, %s9
    %p112 = scmp.lt.s32.totalorder %s9, 3
    %p113 = pnand %p111, %p112
    %p114 = pneg %p113
    // Predicated region
    $region9: #{genn_forward.2} parent=5 // pred_check
      _
    $region10: #{genn_forward.2} parent=5 // pred_check_branch
      %116 = sbr.rel (%p113) target = $region12
    $region11: #{genn_forward.2} parent=5 // pred_region
      %s117 = ssub.s32 %s9, 1
      // Predicated region
      $region13: #{genn_forward.2} parent=11 // pred_check
        %p118 = pneg %p56
      $region14: #{genn_forward.2} parent=11 // pred_check_branch
        %120 = sbr.rel (%p118) target = $region16
      $region15: #{genn_forward.2} parent=11 // pred_region
        _
      $region16: #{genn_forward.2} parent=11 // pred_fallthru
        _
      // Predicated region
      $region17: #{genn_forward.2} parent=11 // pred_check
        %p121 = pneg %p77
      $region18: #{genn_forward.2} parent=11 // pred_check_branch
        %123 = sbr.rel (%p121) target = $region20
      $region19: #{genn_forward.2} parent=11 // pred_region
        _
      $region20: #{genn_forward.2} parent=11 // pred_fallthru
        _
    $region12: #{genn_forward.2} parent=5 // pred_fallthru
      _
    %p124 = scmp.lt.s32.totalorder %s9, 2
    // Predicated region
    $region21: #{genn_forward.2} parent=5 // pred_check
      %p125 = pneg %p124
    $region22: #{genn_forward.2} parent=5 // pred_check_branch
      %127 = sbr.rel (%p125) target = $region24
    $region23: #{genn_forward.2} parent=5 // pred_region
      // Predicated region
      $region25: #{genn_forward.2} parent=23 // pred_check
        %p128 = pneg %p29
      $region26: #{genn_forward.2} parent=23 // pred_check_branch
        %130 = sbr.rel (%p128) target = $region28
      $region27: #{genn_forward.2} parent=23 // pred_region
        %s131 = smul.u32 8, %s9
        %p132 = scmp.lt.s32.totalorder %s131, 15
        %s133 = scalar_select %p132, %s131, 15
        %s134 = smul.addr %s133, 4
        %s135 = scalar_lea.vmem %s0, %s134
        %s136 = smul.u32 8, %s9
      $region28: #{genn_forward.2} parent=23 // pred_fallthru
        _
    $region24: #{genn_forward.2} parent=5 // pred_fallthru
      _
    %p137 = scmp.le.s32.totalorder 1, %s9
    %p138 = scmp.lt.s32.totalorder %s9, 3
    %p139 = pnand %p137, %p138
    %p140 = pneg %p139
    // Predicated region
    $region29: #{genn_forward.2} parent=5 // pred_check
      _
    $region30: #{genn_forward.2} parent=5 // pred_check_branch
      %142 = sbr.rel (%p139) target = $region32
    $region31: #{genn_forward.2} parent=5 // pred_region
      %s143 = ssub.s32 %s9, 1
      %s144 = smul.u32 8, %s14
      %p145 = scmp.lt.s32.totalorder %s144, 15
      %s146 = scalar_select %p145, %s144, 15
      %s147 = smul.addr %s146, 4
      %s148 = scalar_lea.vmem %s0, %s147
      %p149 = pneg %p35
      %p150 = pneg %p32
      %p151 = pneg %p56
      %p152 = pneg %p53
      %p153 = pneg %p77
      %p154 = pneg %p74
      %p155 = pneg %p103
      %p156 = pneg %p100
      %s157 = smul.u32 8, %s14
      %p158 = scmp.lt.s32.totalorder %s157, 15
      %s159 = scalar_select %p158, %s157, 15
      %s160 = smul.addr %s159, 4
      %s161 = scalar_lea.vmem %s3, %s160
      %s162 = smul.u32 8, %s14
      %p163 = scmp.lt.s32.totalorder %s162, 15
      %s164 = scalar_select %p163, %s162, 15
      %s165 = smul.addr %s164, 4
      %s166 = scalar_lea.vmem %s0, %s165
      %s167 = smul.u32 8, %s14
      %s168 = smul.u32 8, %s14
      %p169 = scmp.lt.s32.totalorder %s168, 15
      %s170 = scalar_select %p169, %s168, 15
      %s171 = smul.addr %s170, 4
      %s172 = scalar_lea.vmem %s3, %s171
      %s173 = smul.u32 8, %s14
      %v175 = vld [vmem:[%s166] sm:$0xf]
      %v176 = vld [vmem:[%s166 + $0x4] sm:$0xf]
      %v177 = vld [vmem:[%s166 + $0x8] sm:$0xf]
      %v178 = vld [vmem:[%s166 + $0xc] sm:$0xf]
      %v179 = vld [vmem:[%s166 + $0x10] sm:$0xf]
      %v180 = vld [vmem:[%s166 + $0x14] sm:$0xf]
      %v181 = vld [vmem:[%s166 + $0x18] sm:$0xf]
      %v182 = vld [vmem:[%s166 + $0x1c] sm:$0xf]
      %v183 = vld [vmem:[%s1] sm:$0xf]
      %v184 = vld [vmem:[%s1 + $0x4] sm:$0xf]
      %v185 = vld [vmem:[%s1 + $0x8] sm:$0xf]
      %v186 = vld [vmem:[%s1 + $0xc] sm:$0xf]
      %v187 = vld [vmem:[%s1 + $0x10] sm:$0xf]
      %v188 = vld [vmem:[%s1 + $0x14] sm:$0xf]
      %v189 = vld [vmem:[%s1 + $0x18] sm:$0xf]
      %v190 = vld [vmem:[%s1 + $0x1c] sm:$0xf]
      %v191 = vld [vmem:[%s1 + $0x20] sm:$0xf]
      %v192 = vld [vmem:[%s1 + $0x24] sm:$0xf]
      %v193 = vld [vmem:[%s1 + $0x28] sm:$0xf]
      %v194 = vld [vmem:[%s1 + $0x2c] sm:$0xf]
      %v195 = vld [vmem:[%s1 + $0x30] sm:$0xf]
      %v196 = vld [vmem:[%s1 + $0x34] sm:$0xf]
      %v197 = vld [vmem:[%s1 + $0x38] sm:$0xf]
      %v198 = vld [vmem:[%s1 + $0x3c] sm:$0xf]
      %v207 = vunpack.c.l.b16 %v175
      %v208 = vunpack.c.l.b16 %v176
      %v209 = vunpack.c.l.b16 %v177
      %v210 = vunpack.c.l.b16 %v178
      %v211 = vunpack.c.l.b16 %v179
      %v212 = vunpack.c.l.b16 %v180
      %v213 = vunpack.c.l.b16 %v181
      %v214 = vunpack.c.l.b16 %v182
      %v215 = vpack.c.b16 %v208, %v207
      %v216 = vpack.c.b16 %v210, %v209
      %v217 = vpack.c.b16 %v212, %v211
      %v218 = vpack.c.b16 %v214, %v213
      %v239 = vunpack.c.l.b16 %v183
      %v240 = vunpack.c.l.b16 %v184
      %v241 = vunpack.c.l.b16 %v185
      %v242 = vunpack.c.l.b16 %v186
      %v243 = vunpack.c.l.b16 %v187
      %v244 = vunpack.c.l.b16 %v188
      %v245 = vunpack.c.l.b16 %v189
      %v246 = vunpack.c.l.b16 %v190
      %v247 = vunpack.c.l.b16 %v191
      %v248 = vunpack.c.l.b16 %v192
      %v249 = vunpack.c.l.b16 %v193
      %v250 = vunpack.c.l.b16 %v194
      %v251 = vunpack.c.l.b16 %v195
      %v252 = vunpack.c.l.b16 %v196
      %v253 = vunpack.c.l.b16 %v197
      %v254 = vunpack.c.l.b16 %v198
      %v255 = vpack.c.b16 %v240, %v239
      %v256 = vpack.c.b16 %v242, %v241
      %v257 = vpack.c.b16 %v244, %v243
      %v258 = vpack.c.b16 %v246, %v245
      %v259 = vpack.c.b16 %v248, %v247
      %v260 = vpack.c.b16 %v250, %v249
      %v261 = vpack.c.b16 %v252, %v251
      %v262 = vpack.c.b16 %v254, %v253
      %271 = vmatprep.subr.bf16.mxu0 0
      %272 = vmatpush1.bf16.msra.mxu0 %v262
      %273 = vmatprep.subr.bf16.mxu0 0
      %274 = vmatpush1.bf16.msra.mxu0 %v261
      %275 = vmatprep.subr.bf16.mxu0 0
      %276 = vmatpush1.bf16.msra.mxu0 %v260
      %277 = vmatprep.subr.bf16.mxu0 0
      %278 = vmatpush1.bf16.msra.mxu0 %v259
      %279 = vmatprep.subr.bf16.mxu0 0
      %280 = vmatpush1.bf16.msra.mxu0 %v258
      %281 = vmatprep.subr.bf16.mxu0 0
      %282 = vmatpush1.bf16.msra.mxu0 %v257
      %283 = vmatprep.subr.bf16.mxu0 0
      %284 = vmatpush1.bf16.msra.mxu0 %v256
      %285 = vmatprep.subr.bf16.mxu0 0
      %286 = vmatpush1.bf16.msra.mxu0 %v255
      %287 = vmatprep.subr.bf16.mxu0 0
      %288 = vmatpush2.bf16.msra.mxu0 0
      %289 = vmatprep.subr.bf16.mxu0 0
      %290 = vmatpush2.bf16.msra.mxu0 0
      %291 = vmatprep.subr.bf16.mxu0 0
      %292 = vmatpush2.bf16.msra.mxu0 0
      %293 = vmatprep.subr.bf16.mxu0 0
      %294 = vmatpush2.bf16.msra.mxu0 0
      %295 = vmatprep.subr.bf16.mxu0 0
      %296 = vmatpush2.bf16.msra.mxu0 0
      %297 = vmatprep.subr.bf16.mxu0 0
      %298 = vmatpush2.bf16.msra.mxu0 0
      %299 = vmatprep.subr.bf16.mxu0 0
      %300 = vmatpush2.bf16.msra.mxu0 0
      %301 = vmatprep.subr.bf16.mxu0 0
      %302 = vmatpush2.bf16.msra.mxu0 0
      %303 = vmatprep.mubr.bf16.mxu0 0
      %304 = vmatmul.mubr.bf16.gmra.mxu0 %v215
      %v305 = vpop.f32.mrf.mxu0
      %v306 = vadd.f32 0.0, %v305
      %v307 = vpop.f32.mrf.mxu0
      %v308 = vpop.f32.mrf.mxu0
      %v309 = vadd.f32 0.0, %v308
      %v310 = vpop.f32.mrf.mxu0
      %311 = vmatprep.mubr.bf16.mxu0 0
      %312 = vmatmul.mubr.bf16.gmra.mxu0 %v216
      %v313 = vpop.f32.mrf.mxu0
      %v314 = vadd.f32 0.0, %v313
      %v315 = vpop.f32.mrf.mxu0
      %v316 = vpop.f32.mrf.mxu0
      %v317 = vadd.f32 0.0, %v316
      %v318 = vpop.f32.mrf.mxu0
      %319 = vmatprep.mubr.bf16.mxu0 0
      %320 = vmatmul.mubr.bf16.gmra.mxu0 %v217
      %v321 = vpop.f32.mrf.mxu0
      %v322 = vadd.f32 0.0, %v321
      %v323 = vpop.f32.mrf.mxu0
      %v324 = vpop.f32.mrf.mxu0
      %v325 = vadd.f32 0.0, %v324
      %v326 = vpop.f32.mrf.mxu0
      %327 = vmatprep.mubr.bf16.mxu0 0
      %328 = vmatmul.mubr.bf16.gmra.mxu0 %v218
      %v329 = vpop.f32.mrf.mxu0
      %v330 = vadd.f32 0.0, %v329
      %v331 = vpop.f32.mrf.mxu0
      %v332 = vpop.f32.mrf.mxu0
      %v333 = vadd.f32 0.0, %v332
      %v334 = vpop.f32.mrf.mxu0
      %335 = vdwg.mxu0
      %v336 = vpack.c.bf16 %v309, %v306
      %v337 = vpack.c.bf16 %v317, %v314
      %v338 = vpack.c.bf16 %v325, %v322
      %v339 = vpack.c.bf16 %v333, %v330
      %v340 = vld [vmem:[%s2] sm:$0xf]
      %v341 = vld [vmem:[%s2 + $0x4] sm:$0xf]
      %v342 = vld [vmem:[%s2 + $0x8] sm:$0xf]
      %v343 = vld [vmem:[%s2 + $0xc] sm:$0xf]
      %v348 = vunpack.c.l.b16 %v340
      %v349 = vunpack.c.l.b16 %v341
      %v350 = vunpack.c.l.b16 %v342
      %v351 = vunpack.c.l.b16 %v343
      %v352 = vpack.c.b16 %v349, %v348
      %v353 = vpack.c.b16 %v351, %v350
      %vm356 = vcmask 261120
      %v358 = vsel %vm356, %v336, 0
      %v361 = vsel %vm356, %v337, 0
      %v364 = vsel %vm356, %v338, 0
      %v367 = vsel %vm356, %v339, 0
      %369 = vmatprep.subr.bf16.mxu0 0
      %370 = vmatpush1.bf16.msra.mxu0 0
      %371 = vmatprep.subr.bf16.mxu0 0
      %372 = vmatpush1.bf16.msra.mxu0 0
      %373 = vmatprep.subr.bf16.mxu0 0
      %374 = vmatpush1.bf16.msra.mxu0 0
      %375 = vmatprep.subr.bf16.mxu0 0
      %376 = vmatpush1.bf16.msra.mxu0 0
      %377 = vmatprep.subr.bf16.mxu0 0
      %378 = vmatpush1.bf16.msra.mxu0 0
      %379 = vmatprep.subr.bf16.mxu0 0
      %380 = vmatpush1.bf16.msra.mxu0 0
      %381 = vmatprep.subr.bf16.mxu0 0
      %382 = vmatpush1.bf16.msra.mxu0 %v353
      %383 = vmatprep.subr.bf16.mxu0 0
      %384 = vmatpush1.bf16.msra.mxu0 %v352
      %385 = vmatprep.subr.bf16.mxu0 0
      %386 = vmatpush2.bf16.msra.mxu0 0
      %387 = vmatprep.subr.bf16.mxu0 0
      %388 = vmatpush2.bf16.msra.mxu0 0
      %389 = vmatprep.subr.bf16.mxu0 0
      %390 = vmatpush2.bf16.msra.mxu0 0
      %391 = vmatprep.subr.bf16.mxu0 0
      %392 = vmatpush2.bf16.msra.mxu0 0
      %393 = vmatprep.subr.bf16.mxu0 0
      %394 = vmatpush2.bf16.msra.mxu0 0
      %395 = vmatprep.subr.bf16.mxu0 0
      %396 = vmatpush2.bf16.msra.mxu0 0
      %397 = vmatprep.subr.bf16.mxu0 0
      %398 = vmatpush2.bf16.msra.mxu0 0
      %399 = vmatprep.subr.bf16.mxu0 0
      %400 = vmatpush2.bf16.msra.mxu0 0
      %401 = vmatprep.mubr.bf16.mxu0 0
      %402 = vmatmul.mubr.bf16.gmra.mxu0 %v358
      %v403 = vpop.f32.mrf.mxu0
      %v404 = vadd.f32 0.0, %v403
      %v405 = vpop.f32.mrf.mxu0
      %v406 = vpop.f32.mrf.mxu0
      %v407 = vadd.f32 0.0, %v406
      %v408 = vpop.f32.mrf.mxu0
      %409 = vmatprep.mubr.bf16.mxu0 0
      %410 = vmatmul.mubr.bf16.gmra.mxu0 %v361
      %v411 = vpop.f32.mrf.mxu0
      %v412 = vadd.f32 0.0, %v411
      %v413 = vpop.f32.mrf.mxu0
      %v414 = vpop.f32.mrf.mxu0
      %v415 = vadd.f32 0.0, %v414
      %v416 = vpop.f32.mrf.mxu0
      %417 = vmatprep.mubr.bf16.mxu0 0
      %418 = vmatmul.mubr.bf16.gmra.mxu0 %v364
      %v419 = vpop.f32.mrf.mxu0
      %v420 = vadd.f32 0.0, %v419
      %v421 = vpop.f32.mrf.mxu0
      %v422 = vpop.f32.mrf.mxu0
      %v423 = vadd.f32 0.0, %v422
      %v424 = vpop.f32.mrf.mxu0
      %425 = vmatprep.mubr.bf16.mxu0 0
      %426 = vmatmul.mubr.bf16.gmra.mxu0 %v367
      %v427 = vpop.f32.mrf.mxu0
      %v428 = vadd.f32 0.0, %v427
      %v429 = vpop.f32.mrf.mxu0
      %v430 = vpop.f32.mrf.mxu0
      %v431 = vadd.f32 0.0, %v430
      %v432 = vpop.f32.mrf.mxu0
      %433 = vdwg.mxu0
      %v434 = vmax.f32 %v404, 0.0
      %v435 = vmax.f32 %v407, 0.0
      %v436 = vmax.f32 %v412, 0.0
      %v437 = vmax.f32 %v415, 0.0
      %v438 = vmax.f32 %v420, 0.0
      %v439 = vmax.f32 %v423, 0.0
      %v440 = vmax.f32 %v428, 0.0
      %v441 = vmax.f32 %v431, 0.0
      %v442 = vpack.c.bf16 %v435, %v434
      %v443 = vpack.c.bf16 %v437, %v436
      %v444 = vpack.c.bf16 %v439, %v438
      %v445 = vpack.c.bf16 %v441, %v440
      %v450 = vunpack.c.l.b16 %v442
      %v451 = vunpack.c.h.b16 %v442
      %v452 = vunpack.c.l.b16 %v443
      %v453 = vunpack.c.h.b16 %v443
      %v454 = vunpack.c.l.b16 %v444
      %v455 = vunpack.c.h.b16 %v444
      %v456 = vunpack.c.l.b16 %v445
      %v457 = vunpack.c.h.b16 %v445
      %v458 = vpack.c.b16 %v450, %v450
      %v459 = vpack.c.b16 %v451, %v451
      %v460 = vpack.c.b16 %v452, %v452
      %v461 = vpack.c.b16 %v453, %v453
      %v462 = vpack.c.b16 %v454, %v454
      %v463 = vpack.c.b16 %v455, %v455
      %v464 = vpack.c.b16 %v456, %v456
      %v465 = vpack.c.b16 %v457, %v457
      %474 = vst [vmem:[%s172] sm:$0xf] %v458
      %475 = vst [vmem:[%s172 + $0x4] sm:$0xf] %v459
      %476 = vst [vmem:[%s172 + $0x8] sm:$0xf] %v460
      %477 = vst [vmem:[%s172 + $0xc] sm:$0xf] %v461
      %478 = vst [vmem:[%s172 + $0x10] sm:$0xf] %v462
      %479 = vst [vmem:[%s172 + $0x14] sm:$0xf] %v463
      %480 = vst [vmem:[%s172 + $0x18] sm:$0xf] %v464
      %481 = vst [vmem:[%s172 + $0x1c] sm:$0xf] %v465
      %s482 = smul.u32 8, %s14
      %p483 = scmp.lt.s32.totalorder %s482, 15
      %s484 = scalar_select %p483, %s482, 15
      %s485 = smul.addr %s484, 4
      %s486 = scalar_lea.vmem %s3, %s485
      // Predicated region
      $region33: #{genn_forward.2} parent=31 // pred_check
        %p487 = pneg %p100
      $region34: #{genn_forward.2} parent=31 // pred_check_branch
        %489 = sbr.rel (%p487) target = $region36
      $region35: #{genn_forward.2} parent=31 // pred_region
        %s490 = smul.u32 8, %s14
      $region36: #{genn_forward.2} parent=31 // pred_fallthru
        _
    $region32: #{genn_forward.2} parent=5 // pred_fallthru
      _
    %p491 = scmp.le.s32.totalorder 2, %s9
    // Predicated region
    $region37: #{genn_forward.2} parent=5 // pred_check
      %p492 = pneg %p491
    $region38: #{genn_forward.2} parent=5 // pred_check_branch
      %494 = sbr.rel (%p492) target = $region40
    $region39: #{genn_forward.2} parent=5 // pred_region
      %s495 = ssub.s32 %s9, 2
      // Predicated region
      $region41: #{genn_forward.2} parent=39 // pred_check
        %p496 = pneg %p106
      $region42: #{genn_forward.2} parent=39 // pred_check_branch
        %498 = sbr.rel (%p496) target = $region44
      $region43: #{genn_forward.2} parent=39 // pred_region
        %s499 = smul.u32 8, %s15
        %p500 = scmp.lt.s32.totalorder %s499, 15
        %s501 = scalar_select %p500, %s499, 15
        %s502 = smul.addr %s501, 4
        %s503 = scalar_lea.vmem %s3, %s502
      $region44: #{genn_forward.2} parent=39 // pred_fallthru
        _
    $region40: #{genn_forward.2} parent=5 // pred_fallthru
      _
  $region6: #{genn_forward.2} parent=0 // loop_footer
    %s13 = sadd.s32 1, %s9
  $region7: #{genn_forward.2} parent=0 // loop_footer_branch
    %8 = sbr.rel target = $region3
  $region8: #{genn_forward.2} parent=0 // loop_exit
    _

// kernel: genn_forward.3
$region0: #{genn_forward.3}
  #allocation0 [shape = 'u32[]', space=smem, size = 0x4, offset = 0x4, fixed_abs, tag = 'smem constant byte address 0x4 - core index']
  #allocation1 [shape = 'u32[144,128]{1,0:T(1,128)}', space=vmem, size = 0x12000, scoped, tag = 'internal scratch']
  %s0 = inlined_call_operand.vmem [shape: bf16[128,128], index: 0, kind: input, shape index: {}]
  %s1 = inlined_call_operand.vmem [shape: bf16[128,128], index: 1, kind: input, shape index: {}]
  %s2 = inlined_call_operand.vmem [shape: bf16[128,128], index: 2, kind: input, shape index: {}]
  %s3 = inlined_call_operand.vmem [shape: f32[128,128], index: 3, kind: output, shape index: {}]
  %s4 = sld [smem:[#allocation0]]
  $region45: #{genn_forward.3} parent=0
    _
  %s6 = ssub.s32 1, %s4
  %s7 = scalar_select 0, %s6, %s4
  loop: start=0, step=1, limit=4
  $region2: #{genn_forward.3} parent=0 // loop_pre_header
    _
  $region3: #{genn_forward.3} parent=0 // loop_header
    %s9 = sphi 0, %s13
    %p10 = scmp.ge.s32.totalorder %s9, 4
    %s19 = sphi 0, %s21
    %s22 = sphi 0, %s19
    %s23 = sphi 0, %s22
    %s39 = sphi 0, %s23
    %s43 = sphi 0, %s43
    %s45 = sphi 0, %s43
    %s46 = sphi 0, %s45
    %s60 = sphi 0, %s46
    %s64 = sphi 0, %s64
    %s66 = sphi 0, %s64
    %s67 = sphi 0, %s66
    %s81 = sphi 0, %s67
    %s87 = sphi 0, %s89
    %s90 = sphi 0, %s87
    %s91 = sphi 0, %s90
    %s107 = sphi 0, %s91
  $region4: #{genn_forward.3} parent=0 // loop_header_branch
    %12 = sbr.rel (%p10) target = $region8
  $region5: #{genn_forward.3} parent=0 // loop_body
    %s14 = ssub.s32 %s9, 1
    %s15 = ssub.s32 %s9, 2
    %s16 = sadd.s32 %s9, 1
    %s17 = ssub.s32 %s9, %s16
    %p18 = scmp.eq.s32.totalorder %s17, 0
    %s20 = sadd.s32 %s19, 1
    %s21 = scalar_select %p18, %s19, %s20
    %p24 = pneg %p18
    %p25 = scmp.eq.s32.totalorder %s9, 1
    %p26 = por %p24, %p25
    %p27 = scmp.ne.s32.totalorder %s19, %s22
    %p28 = scmp.eq.s32.totalorder %s9, 0
    %p29 = por %p27, %p28
    %p30 = scmp.ne.s32.totalorder %s19, %s22
    %p31 = scmp.eq.s32.totalorder %s14, 1
    %p32 = por %p30, %p31
    %p33 = scmp.ne.s32.totalorder %s22, %s23
    %p34 = scmp.eq.s32.totalorder %s14, 0
    %p35 = por %p33, %p34
    %p36 = scmp.ne.s32.totalorder %s22, %s23
    %p37 = scmp.eq.s32.totalorder %s15, 1
    %p38 = por %p36, %p37
    %p40 = scmp.ne.s32.totalorder %s23, %s39
    %p41 = scmp.eq.s32.totalorder %s15, 0
    %p42 = por %p40, %p41
    %s44 = sadd.s32 %s43, 1
    %p47 = scmp.eq.s32.totalorder %s9, 1
    %p48 = scmp.ne.s32.totalorder %s43, %s45
    %p49 = scmp.eq.s32.totalorder %s9, 0
    %p50 = por %p48, %p49
    %p51 = scmp.ne.s32.totalorder %s43, %s45
    %p52 = scmp.eq.s32.totalorder %s14, 1
    %p53 = por %p51, %p52
    %p54 = scmp.ne.s32.totalorder %s45, %s46
    %p55 = scmp.eq.s32.totalorder %s14, 0
    %p56 = por %p54, %p55
    %p57 = scmp.ne.s32.totalorder %s45, %s46
    %p58 = scmp.eq.s32.totalorder %s15, 1
    %p59 = por %p57, %p58
    %p61 = scmp.ne.s32.totalorder %s46, %s60
    %p62 = scmp.eq.s32.totalorder %s15, 0
    %p63 = por %p61, %p62
    %s65 = sadd.s32 %s64, 1
    %p68 = scmp.eq.s32.totalorder %s9, 1
    %p69 = scmp.ne.s32.totalorder %s64, %s66
    %p70 = scmp.eq.s32.totalorder %s9, 0
    %p71 = por %p69, %p70
    %p72 = scmp.ne.s32.totalorder %s64, %s66
    %p73 = scmp.eq.s32.totalorder %s14, 1
    %p74 = por %p72, %p73
    %p75 = scmp.ne.s32.totalorder %s66, %s67
    %p76 = scmp.eq.s32.totalorder %s14, 0
    %p77 = por %p75, %p76
    %p78 = scmp.ne.s32.totalorder %s66, %s67
    %p79 = scmp.eq.s32.totalorder %s15, 1
    %p80 = por %p78, %p79
    %p82 = scmp.ne.s32.totalorder %s67, %s81
    %p83 = scmp.eq.s32.totalorder %s15, 0
    %p84 = por %p82, %p83
    %s85 = ssub.s32 %s9, %s16
    %p86 = scmp.eq.s32.totalorder %s85, 0
    %s88 = sadd.s32 %s87, 1
    %s89 = scalar_select %p86, %s87, %s88
    %p92 = pneg %p86
    %p93 = scmp.eq.s32.totalorder %s9, 1
    %p94 = por %p92, %p93
    %p95 = scmp.ne.s32.totalorder %s87, %s90
    %p96 = scmp.eq.s32.totalorder %s9, 0
    %p97 = por %p95, %p96
    %p98 = scmp.ne.s32.totalorder %s87, %s90
    %p99 = scmp.eq.s32.totalorder %s14, 1
    %p100 = por %p98, %p99
    %p101 = scmp.ne.s32.totalorder %s90, %s91
    %p102 = scmp.eq.s32.totalorder %s14, 0
    %p103 = por %p101, %p102
    %p104 = scmp.ne.s32.totalorder %s90, %s91
    %p105 = scmp.eq.s32.totalorder %s15, 1
    %p106 = por %p104, %p105
    %p108 = scmp.ne.s32.totalorder %s91, %s107
    %p109 = scmp.eq.s32.totalorder %s15, 0
    %p110 = por %p108, %p109
    %p111 = scmp.le.s32.totalorder 1, %s9
    %p112 = scmp.lt.s32.totalorder %s9, 3
    %p113 = pnand %p111, %p112
    %p114 = pneg %p113
    // Predicated region
    $region9: #{genn_forward.3} parent=5 // pred_check
      _
    $region10: #{genn_forward.3} parent=5 // pred_check_branch
      %116 = sbr.rel (%p113) target = $region12
    $region11: #{genn_forward.3} parent=5 // pred_region
      %s117 = ssub.s32 %s9, 1
      // Predicated region
      $region13: #{genn_forward.3} parent=11 // pred_check
        %p118 = pneg %p56
      $region14: #{genn_forward.3} parent=11 // pred_check_branch
        %120 = sbr.rel (%p118) target = $region16
      $region15: #{genn_forward.3} parent=11 // pred_region
        _
      $region16: #{genn_forward.3} parent=11 // pred_fallthru
        _
      // Predicated region
      $region17: #{genn_forward.3} parent=11 // pred_check
        %p121 = pneg %p77
      $region18: #{genn_forward.3} parent=11 // pred_check_branch
        %123 = sbr.rel (%p121) target = $region20
      $region19: #{genn_forward.3} parent=11 // pred_region
        _
      $region20: #{genn_forward.3} parent=11 // pred_fallthru
        _
    $region12: #{genn_forward.3} parent=5 // pred_fallthru
      _
    %p124 = scmp.lt.s32.totalorder %s9, 2
    // Predicated region
    $region21: #{genn_forward.3} parent=5 // pred_check
      %p125 = pneg %p124
    $region22: #{genn_forward.3} parent=5 // pred_check_branch
      %127 = sbr.rel (%p125) target = $region24
    $region23: #{genn_forward.3} parent=5 // pred_region
      // Predicated region
      $region25: #{genn_forward.3} parent=23 // pred_check
        %p128 = pneg %p29
      $region26: #{genn_forward.3} parent=23 // pred_check_branch
        %130 = sbr.rel (%p128) target = $region28
      $region27: #{genn_forward.3} parent=23 // pred_region
        %s131 = smul.u32 8, %s9
        %p132 = scmp.lt.s32.totalorder %s131, 15
        %s133 = scalar_select %p132, %s131, 15
        %s134 = smul.addr %s133, 4
        %s135 = scalar_lea.vmem %s0, %s134
        %s136 = smul.u32 8, %s9
      $region28: #{genn_forward.3} parent=23 // pred_fallthru
        _
    $region24: #{genn_forward.3} parent=5 // pred_fallthru
      _
    %p137 = scmp.le.s32.totalorder 1, %s9
    %p138 = scmp.lt.s32.totalorder %s9, 3
    %p139 = pnand %p137, %p138
    %p140 = pneg %p139
    // Predicated region
    $region29: #{genn_forward.3} parent=5 // pred_check
      _
    $region30: #{genn_forward.3} parent=5 // pred_check_branch
      %142 = sbr.rel (%p139) target = $region32
    $region31: #{genn_forward.3} parent=5 // pred_region
      %s143 = ssub.s32 %s9, 1
      %s144 = smul.u32 8, %s14
      %p145 = scmp.lt.s32.totalorder %s144, 15
      %s146 = scalar_select %p145, %s144, 15
      %s147 = smul.addr %s146, 4
      %s148 = scalar_lea.vmem %s0, %s147
      %p149 = pneg %p35
      %p150 = pneg %p32
      %p151 = pneg %p56
      %p152 = pneg %p53
      %p153 = pneg %p77
      %p154 = pneg %p74
      %p155 = pneg %p103
      %p156 = pneg %p100
      %s157 = smul.u32 8, %s14
      %p158 = scmp.lt.s32.totalorder %s157, 15
      %s159 = scalar_select %p158, %s157, 15
      %s160 = smul.addr %s159, 8
      %s161 = scalar_lea.vmem %s3, %s160
      %s162 = smul.u32 8, %s14
      %p163 = scmp.lt.s32.totalorder %s162, 15
      %s164 = scalar_select %p163, %s162, 15
      %s165 = smul.addr %s164, 4
      %s166 = scalar_lea.vmem %s0, %s165
      %s167 = smul.u32 8, %s14
      %s168 = smul.u32 8, %s14
      %p169 = scmp.lt.s32.totalorder %s168, 15
      %s170 = scalar_select %p169, %s168, 15
      %s171 = smul.addr %s170, 8
      %s172 = scalar_lea.vmem %s3, %s171
      %s173 = smul.u32 8, %s14
      %v175 = vld [vmem:[%s166] sm:$0xf]
      %v176 = vld [vmem:[%s166 + $0x4] sm:$0xf]
      %v177 = vld [vmem:[%s166 + $0x8] sm:$0xf]
      %v178 = vld [vmem:[%s166 + $0xc] sm:$0xf]
      %v179 = vld [vmem:[%s166 + $0x10] sm:$0xf]
      %v180 = vld [vmem:[%s166 + $0x14] sm:$0xf]
      %v181 = vld [vmem:[%s166 + $0x18] sm:$0xf]
      %v182 = vld [vmem:[%s166 + $0x1c] sm:$0xf]
      %v183 = vld [vmem:[%s1] sm:$0xf]
      %v184 = vld [vmem:[%s1 + $0x4] sm:$0xf]
      %v185 = vld [vmem:[%s1 + $0x8] sm:$0xf]
      %v186 = vld [vmem:[%s1 + $0xc] sm:$0xf]
      %v187 = vld [vmem:[%s1 + $0x10] sm:$0xf]
      %v188 = vld [vmem:[%s1 + $0x14] sm:$0xf]
      %v189 = vld [vmem:[%s1 + $0x18] sm:$0xf]
      %v190 = vld [vmem:[%s1 + $0x1c] sm:$0xf]
      %v191 = vld [vmem:[%s1 + $0x20] sm:$0xf]
      %v192 = vld [vmem:[%s1 + $0x24] sm:$0xf]
      %v193 = vld [vmem:[%s1 + $0x28] sm:$0xf]
      %v194 = vld [vmem:[%s1 + $0x2c] sm:$0xf]
      %v195 = vld [vmem:[%s1 + $0x30] sm:$0xf]
      %v196 = vld [vmem:[%s1 + $0x34] sm:$0xf]
      %v197 = vld [vmem:[%s1 + $0x38] sm:$0xf]
      %v198 = vld [vmem:[%s1 + $0x3c] sm:$0xf]
      %v207 = vunpack.c.l.b16 %v175
      %v208 = vunpack.c.l.b16 %v176
      %v209 = vunpack.c.l.b16 %v177
      %v210 = vunpack.c.l.b16 %v178
      %v211 = vunpack.c.l.b16 %v179
      %v212 = vunpack.c.l.b16 %v180
      %v213 = vunpack.c.l.b16 %v181
      %v214 = vunpack.c.l.b16 %v182
      %v215 = vpack.c.b16 %v208, %v207
      %v216 = vpack.c.b16 %v210, %v209
      %v217 = vpack.c.b16 %v212, %v211
      %v218 = vpack.c.b16 %v214, %v213
      %v239 = vunpack.c.l.b16 %v183
      %v240 = vunpack.c.l.b16 %v184
      %v241 = vunpack.c.l.b16 %v185
      %v242 = vunpack.c.l.b16 %v186
      %v243 = vunpack.c.l.b16 %v187
      %v244 = vunpack.c.l.b16 %v188
      %v245 = vunpack.c.l.b16 %v189
      %v246 = vunpack.c.l.b16 %v190
      %v247 = vunpack.c.l.b16 %v191
      %v248 = vunpack.c.l.b16 %v192
      %v249 = vunpack.c.l.b16 %v193
      %v250 = vunpack.c.l.b16 %v194
      %v251 = vunpack.c.l.b16 %v195
      %v252 = vunpack.c.l.b16 %v196
      %v253 = vunpack.c.l.b16 %v197
      %v254 = vunpack.c.l.b16 %v198
      %v255 = vpack.c.b16 %v240, %v239
      %v256 = vpack.c.b16 %v242, %v241
      %v257 = vpack.c.b16 %v244, %v243
      %v258 = vpack.c.b16 %v246, %v245
      %v259 = vpack.c.b16 %v248, %v247
      %v260 = vpack.c.b16 %v250, %v249
      %v261 = vpack.c.b16 %v252, %v251
      %v262 = vpack.c.b16 %v254, %v253
      %271 = vmatprep.subr.bf16.mxu0 0
      %272 = vmatpush1.bf16.msra.mxu0 %v262
      %273 = vmatprep.subr.bf16.mxu0 0
      %274 = vmatpush1.bf16.msra.mxu0 %v261
      %275 = vmatprep.subr.bf16.mxu0 0
      %276 = vmatpush1.bf16.msra.mxu0 %v260
      %277 = vmatprep.subr.bf16.mxu0 0
      %278 = vmatpush1.bf16.msra.mxu0 %v259
      %279 = vmatprep.subr.bf16.mxu0 0
      %280 = vmatpush1.bf16.msra.mxu0 %v258
      %281 = vmatprep.subr.bf16.mxu0 0
      %282 = vmatpush1.bf16.msra.mxu0 %v257
      %283 = vmatprep.subr.bf16.mxu0 0
      %284 = vmatpush1.bf16.msra.mxu0 %v256
      %285 = vmatprep.subr.bf16.mxu0 0
      %286 = vmatpush1.bf16.msra.mxu0 %v255
      %287 = vmatprep.subr.bf16.mxu0 0
      %288 = vmatpush2.bf16.msra.mxu0 0
      %289 = vmatprep.subr.bf16.mxu0 0
      %290 = vmatpush2.bf16.msra.mxu0 0
      %291 = vmatprep.subr.bf16.mxu0 0
      %292 = vmatpush2.bf16.msra.mxu0 0
      %293 = vmatprep.subr.bf16.mxu0 0
      %294 = vmatpush2.bf16.msra.mxu0 0
      %295 = vmatprep.subr.bf16.mxu0 0
      %296 = vmatpush2.bf16.msra.mxu0 0
      %297 = vmatprep.subr.bf16.mxu0 0
      %298 = vmatpush2.bf16.msra.mxu0 0
      %299 = vmatprep.subr.bf16.mxu0 0
      %300 = vmatpush2.bf16.msra.mxu0 0
      %301 = vmatprep.subr.bf16.mxu0 0
      %302 = vmatpush2.bf16.msra.mxu0 0
      %303 = vmatprep.mubr.bf16.mxu0 0
      %304 = vmatmul.mubr.bf16.gmra.mxu0 %v215
      %v305 = vpop.f32.mrf.mxu0
      %v306 = vadd.f32 0.0, %v305
      %v307 = vpop.f32.mrf.mxu0
      %v308 = vpop.f32.mrf.mxu0
      %v309 = vadd.f32 0.0, %v308
      %v310 = vpop.f32.mrf.mxu0
      %311 = vmatprep.mubr.bf16.mxu0 0
      %312 = vmatmul.mubr.bf16.gmra.mxu0 %v216
      %v313 = vpop.f32.mrf.mxu0
      %v314 = vadd.f32 0.0, %v313
      %v315 = vpop.f32.mrf.mxu0
      %v316 = vpop.f32.mrf.mxu0
      %v317 = vadd.f32 0.0, %v316
      %v318 = vpop.f32.mrf.mxu0
      %319 = vmatprep.mubr.bf16.mxu0 0
      %320 = vmatmul.mubr.bf16.gmra.mxu0 %v217
      %v321 = vpop.f32.mrf.mxu0
      %v322 = vadd.f32 0.0, %v321
      %v323 = vpop.f32.mrf.mxu0
      %v324 = vpop.f32.mrf.mxu0
      %v325 = vadd.f32 0.0, %v324
      %v326 = vpop.f32.mrf.mxu0
      %327 = vmatprep.mubr.bf16.mxu0 0
      %328 = vmatmul.mubr.bf16.gmra.mxu0 %v218
      %v329 = vpop.f32.mrf.mxu0
      %v330 = vadd.f32 0.0, %v329
      %v331 = vpop.f32.mrf.mxu0
      %v332 = vpop.f32.mrf.mxu0
      %v333 = vadd.f32 0.0, %v332
      %v334 = vpop.f32.mrf.mxu0
      %335 = vdwg.mxu0
      %v336 = vpack.c.bf16 %v309, %v306
      %v337 = vpack.c.bf16 %v317, %v314
      %v338 = vpack.c.bf16 %v325, %v322
      %v339 = vpack.c.bf16 %v333, %v330
      %v340 = vld [vmem:[%s2] sm:$0xf]
      %v341 = vld [vmem:[%s2 + $0x4] sm:$0xf]
      %v342 = vld [vmem:[%s2 + $0x8] sm:$0xf]
      %v343 = vld [vmem:[%s2 + $0xc] sm:$0xf]
      %v344 = vld [vmem:[%s2 + $0x10] sm:$0xf]
      %v345 = vld [vmem:[%s2 + $0x14] sm:$0xf]
      %v346 = vld [vmem:[%s2 + $0x18] sm:$0xf]
      %v347 = vld [vmem:[%s2 + $0x1c] sm:$0xf]
      %v348 = vld [vmem:[%s2 + $0x20] sm:$0xf]
      %v349 = vld [vmem:[%s2 + $0x24] sm:$0xf]
      %v350 = vld [vmem:[%s2 + $0x28] sm:$0xf]
      %v351 = vld [vmem:[%s2 + $0x2c] sm:$0xf]
      %v352 = vld [vmem:[%s2 + $0x30] sm:$0xf]
      %v353 = vld [vmem:[%s2 + $0x34] sm:$0xf]
      %v354 = vld [vmem:[%s2 + $0x38] sm:$0xf]
      %v355 = vld [vmem:[%s2 + $0x3c] sm:$0xf]
      %v372 = vunpack.c.l.b16 %v340
      %v373 = vunpack.c.l.b16 %v341
      %v374 = vunpack.c.l.b16 %v342
      %v375 = vunpack.c.l.b16 %v343
      %v376 = vunpack.c.l.b16 %v344
      %v377 = vunpack.c.l.b16 %v345
      %v378 = vunpack.c.l.b16 %v346
      %v379 = vunpack.c.l.b16 %v347
      %v380 = vunpack.c.l.b16 %v348
      %v381 = vunpack.c.l.b16 %v349
      %v382 = vunpack.c.l.b16 %v350
      %v383 = vunpack.c.l.b16 %v351
      %v384 = vunpack.c.l.b16 %v352
      %v385 = vunpack.c.l.b16 %v353
      %v386 = vunpack.c.l.b16 %v354
      %v387 = vunpack.c.l.b16 %v355
      %v388 = vpack.c.b16 %v373, %v372
      %v389 = vpack.c.b16 %v375, %v374
      %v390 = vpack.c.b16 %v377, %v376
      %v391 = vpack.c.b16 %v379, %v378
      %v392 = vpack.c.b16 %v381, %v380
      %v393 = vpack.c.b16 %v383, %v382
      %v394 = vpack.c.b16 %v385, %v384
      %v395 = vpack.c.b16 %v387, %v386
      %404 = vmatprep.subr.bf16.mxu0 0
      %405 = vmatpush1.bf16.msra.mxu0 %v395
      %406 = vmatprep.subr.bf16.mxu0 0
      %407 = vmatpush1.bf16.msra.mxu0 %v394
      %408 = vmatprep.subr.bf16.mxu0 0
      %409 = vmatpush1.bf16.msra.mxu0 %v393
      %410 = vmatprep.subr.bf16.mxu0 0
      %411 = vmatpush1.bf16.msra.mxu0 %v392
      %412 = vmatprep.subr.bf16.mxu0 0
      %413 = vmatpush1.bf16.msra.mxu0 %v391
      %414 = vmatprep.subr.bf16.mxu0 0
      %415 = vmatpush1.bf16.msra.mxu0 %v390
      %416 = vmatprep.subr.bf16.mxu0 0
      %417 = vmatpush1.bf16.msra.mxu0 %v389
      %418 = vmatprep.subr.bf16.mxu0 0
      %419 = vmatpush1.bf16.msra.mxu0 %v388
      %420 = vmatprep.subr.bf16.mxu0 0
      %421 = vmatpush2.bf16.msra.mxu0 0
      %422 = vmatprep.subr.bf16.mxu0 0
      %423 = vmatpush2.bf16.msra.mxu0 0
      %424 = vmatprep.subr.bf16.mxu0 0
      %425 = vmatpush2.bf16.msra.mxu0 0
      %426 = vmatprep.subr.bf16.mxu0 0
      %427 = vmatpush2.bf16.msra.mxu0 0
      %428 = vmatprep.subr.bf16.mxu0 0
      %429 = vmatpush2.bf16.msra.mxu0 0
      %430 = vmatprep.subr.bf16.mxu0 0
      %431 = vmatpush2.bf16.msra.mxu0 0
      %432 = vmatprep.subr.bf16.mxu0 0
      %433 = vmatpush2.bf16.msra.mxu0 0
      %434 = vmatprep.subr.bf16.mxu0 0
      %435 = vmatpush2.bf16.msra.mxu0 0
      %436 = vmatprep.mubr.bf16.mxu0 0
      %437 = vmatmul.mubr.bf16.gmra.mxu0 %v336
      %v438 = vpop.f32.mrf.mxu0
      %v439 = vadd.f32 0.0, %v438
      %v440 = vpop.f32.mrf.mxu0
      %v441 = vpop.f32.mrf.mxu0
      %v442 = vadd.f32 0.0, %v441
      %v443 = vpop.f32.mrf.mxu0
      %444 = vmatprep.mubr.bf16.mxu0 0
      %445 = vmatmul.mubr.bf16.gmra.mxu0 %v337
      %v446 = vpop.f32.mrf.mxu0
      %v447 = vadd.f32 0.0, %v446
      %v448 = vpop.f32.mrf.mxu0
      %v449 = vpop.f32.mrf.mxu0
      %v450 = vadd.f32 0.0, %v449
      %v451 = vpop.f32.mrf.mxu0
      %452 = vmatprep.mubr.bf16.mxu0 0
      %453 = vmatmul.mubr.bf16.gmra.mxu0 %v338
      %v454 = vpop.f32.mrf.mxu0
      %v455 = vadd.f32 0.0, %v454
      %v456 = vpop.f32.mrf.mxu0
      %v457 = vpop.f32.mrf.mxu0
      %v458 = vadd.f32 0.0, %v457
      %v459 = vpop.f32.mrf.mxu0
      %460 = vmatprep.mubr.bf16.mxu0 0
      %461 = vmatmul.mubr.bf16.gmra.mxu0 %v339
      %v462 = vpop.f32.mrf.mxu0
      %v463 = vadd.f32 0.0, %v462
      %v464 = vpop.f32.mrf.mxu0
      %v465 = vpop.f32.mrf.mxu0
      %v466 = vadd.f32 0.0, %v465
      %v467 = vpop.f32.mrf.mxu0
      %468 = vdwg.mxu0
      %v469 = vmax.f32 %v439, 0.0
      %v470 = vmax.f32 %v442, 0.0
      %v471 = vmax.f32 %v447, 0.0
      %v472 = vmax.f32 %v450, 0.0
      %v473 = vmax.f32 %v455, 0.0
      %v474 = vmax.f32 %v458, 0.0
      %v475 = vmax.f32 %v463, 0.0
      %v476 = vmax.f32 %v466, 0.0
      %477 = vst [vmem:[%s172] sm:$0xff] %v469
      %478 = vst [vmem:[%s172 + $0x8] sm:$0xff] %v470
      %479 = vst [vmem:[%s172 + $0x10] sm:$0xff] %v471
      %480 = vst [vmem:[%s172 + $0x18] sm:$0xff] %v472
      %481 = vst [vmem:[%s172 + $0x20] sm:$0xff] %v473
      %482 = vst [vmem:[%s172 + $0x28] sm:$0xff] %v474
      %483 = vst [vmem:[%s172 + $0x30] sm:$0xff] %v475
      %484 = vst [vmem:[%s172 + $0x38] sm:$0xff] %v476
      %s485 = smul.u32 8, %s14
      %p486 = scmp.lt.s32.totalorder %s485, 15
      %s487 = scalar_select %p486, %s485, 15
      %s488 = smul.addr %s487, 8
      %s489 = scalar_lea.vmem %s3, %s488
      // Predicated region
      $region33: #{genn_forward.3} parent=31 // pred_check
        %p490 = pneg %p100
      $region34: #{genn_forward.3} parent=31 // pred_check_branch
        %492 = sbr.rel (%p490) target = $region36
      $region35: #{genn_forward.3} parent=31 // pred_region
        %s493 = smul.u32 8, %s14
      $region36: #{genn_forward.3} parent=31 // pred_fallthru
        _
    $region32: #{genn_forward.3} parent=5 // pred_fallthru
      _
    %p494 = scmp.le.s32.totalorder 2, %s9
    // Predicated region
    $region37: #{genn_forward.3} parent=5 // pred_check
      %p495 = pneg %p494
    $region38: #{genn_forward.3} parent=5 // pred_check_branch
      %497 = sbr.rel (%p495) target = $region40
    $region39: #{genn_forward.3} parent=5 // pred_region
      %s498 = ssub.s32 %s9, 2
      // Predicated region
      $region41: #{genn_forward.3} parent=39 // pred_check
        %p499 = pneg %p106
      $region42: #{genn_forward.3} parent=39 // pred_check_branch
        %501 = sbr.rel (%p499) target = $region44
      $region43: #{genn_forward.3} parent=39 // pred_region
        %s502 = smul.u32 8, %s15
        %p503 = scmp.lt.s32.totalorder %s502, 15
        %s504 = scalar_select %p503, %s502, 15
        %s505 = smul.addr %s504, 8
        %s506 = scalar_lea.vmem %s3, %s505
      $region44: #{genn_forward.3} parent=39 // pred_fallthru
        _
    $region40: #{genn_forward.3} parent=5 // pred_fallthru
      _
  $region6: #{genn_forward.3} parent=0 // loop_footer
    %s13 = sadd.s32 1, %s9
  $region7: #{genn_forward.3} parent=0 // loop_footer_branch
    %8 = sbr.rel target = $region3
  $region8: #{genn_forward.3} parent=0 // loop_exit
    _

</llo_original>
